<compile_context>
chip_gen: v7x
topology: tpu7x:2x2x1
jax: 0.10.0
libtpu: 0.0.40
codegen_flags: <defaults>
</compile_context>

<pallas_src>
import jax
import jax.numpy as jnp
from jax.experimental import pallas as pl
from jax.experimental.pallas import tpu as pltpu


# --------------------------------------------------------------------------
# Kernel
# --------------------------------------------------------------------------
def _to_channels_first_kernel(x_ref, o_ref):
    # x_ref block: (tHW, C)  ->  o_ref block: (C, tHW)
    x = x_ref[...]
    if jnp.dtype(x.dtype).itemsize < 4:
        # Upcast so the XLU transpose works on full-sublane f32 vregs instead
        # of packed bf16/int8 rows (avoids pack/unpack relayouts + masked
        # sub-row stores). Exact for bf16/f16/int8/uint8/fp8 values.
        x = x.astype(jnp.float32)
    o_ref[...] = x.T.astype(o_ref.dtype)


# --------------------------------------------------------------------------
# Sizing helpers (padded-VMEM accounting)
# --------------------------------------------------------------------------
def _cdiv(a, b):
    return -(-a // b)


def _round_up(a, b):
    return _cdiv(a, b) * b


def _block_vmem_bytes(rows, cols, itemsize):
    """Padded VMEM footprint of a (rows, cols) block: lanes round to 128,
    sublanes round to 8 * (32-bit packing factor)."""
    pack = max(1, 4 // itemsize)          # 1 for f32, 2 for bf16, 4 for int8
    srows = _round_up(max(rows, 1), 8 * pack)
    scols = _round_up(max(cols, 1), 128)
    return srows * scols * itemsize


def _pipeline_footprint(t_hw, c, itemsize, upcast):
    """Double-buffered padded footprint of one grid step (+ f32 transient
    headroom when the kernel upcasts packed dtypes for the transpose)."""
    in_b = _block_vmem_bytes(t_hw, c, itemsize)
    out_b = _block_vmem_bytes(c, t_hw, itemsize)
    total = 2 * (in_b + out_b)            # 2x: double buffering per operand
    if upcast:
        total += _block_vmem_bytes(t_hw, c, 4) + _block_vmem_bytes(c, t_hw, 4)
    return total


def _vmem_capacity_bytes():
    try:
        return int(pltpu.get_tpu_info().vmem_capacity_bytes)
    except Exception:
        return 64 * 1024 * 1024           # conservative: v7x per-TC VMEM


def _choose_tile_hw(hw, c, itemsize, upcast, budget_bytes, min_hw_blocks):
    """Largest HW tile (multiple of 128, or full extent) whose padded,
    double-buffered footprint fits `budget_bytes` and which yields at least
    `min_hw_blocks` blocks along HW. Prefers an evenly dividing tile when it
    costs no extra grid steps (avoids the masked remainder block)."""
    if hw <= 128:
        return hw

    top = (hw // 128) * 128
    cands = {hw}                          # full extent is always a legal block
    t = top
    while t >= 128:
        cands.add(t)
        t -= 128
    cands = sorted(cands, reverse=True)

    def ok(tile):
        if _cdiv(hw, tile) < min_hw_blocks:
            return False
        return _pipeline_footprint(tile, c, itemsize, upcast) <= budget_bytes

    best = None
    for tile in cands:                    # descending: first hit is largest
        if ok(tile):
            best = tile
            break
    if best is None:
        return 128                        # minimal tile; vmem_limit is raised

    # Prefer a divisor of HW with the same number of grid steps.
    steps = _cdiv(hw, best)
    for tile in cands:
        if tile <= best and hw % tile == 0 and _cdiv(hw, tile) == steps:
            return tile
    return best


# --------------------------------------------------------------------------
# Wrapper
# --------------------------------------------------------------------------
def to_channels_first(x):
    """NHWC -> NCHW permutation done inside a Pallas kernel.

    x: [N, H, W, C]  ->  returns [N, C, H, W]
    """
    N, H, W, C = x.shape
    HW = H * W
    itemsize = jnp.dtype(x.dtype).itemsize
    upcast = itemsize < 4

    # Free metadata reshape: view the input as (N, HW, C).
    x2 = x.reshape(N, HW, C)

    # Per-generation VMEM budget for the pipelined blocks.
    capacity = _vmem_capacity_bytes()
    budget = min(capacity // 2, 32 * 1024 * 1024)

    # Make sure both v7x TensorCores get work even for N == 1 (target ~4
    # total blocks), without dropping the HW tile below 128.
    target_total_blocks = 4
    min_hw_blocks = max(1, _cdiv(target_total_blocks, N))
    min_hw_blocks = min(min_hw_blocks, max(1, HW // 128))

    tHW = _choose_tile_hw(HW, C, itemsize, upcast, budget, min_hw_blocks)
    num_hw_tiles = _cdiv(HW, tHW)
    grid = (N, num_hw_tiles)

    # Explicit scoped-VMEM limit sized to the chosen buffers (v5e default is
    # only 16 MiB); never ask for more than ~3/4 of physical VMEM.
    footprint = _pipeline_footprint(tHW, C, itemsize, upcast)
    vmem_limit = int(min(capacity * 3 // 4,
                         max(2 * footprint, 16 * 1024 * 1024)))

    # Deeper input buffering only helps when blocks are tiny and the grid is
    # long (hides exposed DMA latency); otherwise save VMEM.
    per_block_bytes = (_block_vmem_bytes(tHW, C, itemsize)
                       + _block_vmem_bytes(C, tHW, itemsize))
    use_deep_buffering = per_block_bytes <= 512 * 1024 and N * num_hw_tiles >= 8

    in_block = (pl.Squeezed(), tHW, C)
    in_map = lambda n, t: (n, t, 0)
    if use_deep_buffering:
        in_spec = pl.BlockSpec(in_block, in_map, pipeline_mode=pl.Buffered(3))
    else:
        in_spec = pl.BlockSpec(in_block, in_map)

    out_flat = pl.pallas_call(
        _to_channels_first_kernel,
        out_shape=jax.ShapeDtypeStruct((N, C, HW), x.dtype),
        grid_spec=pltpu.PrefetchScalarGridSpec(
            num_scalar_prefetch=0,
            grid=grid,
            in_specs=[in_spec],
            # Lane-dense output slab: minor dim is tHW (a multiple of 128 for
            # all but at most one remainder block), so stores are unmasked.
            out_specs=pl.BlockSpec((pl.Squeezed(), C, tHW),
                                   lambda n, t: (n, 0, t)),
        ),
        compiler_params=pltpu.CompilerParams(
            dimension_semantics=("parallel", "parallel"),
            vmem_limit_bytes=vmem_limit,
        ),
        cost_estimate=pl.CostEstimate(
            flops=0,
            transcendentals=0,
            bytes_accessed=2 * N * HW * C * itemsize,
        ),
    )(x2)

    # Free metadata reshape back to NCHW.
    return out_flat.reshape(N, C, H, W)


if __name__ == "__main__":
    key = jax.random.PRNGKey(0)
    # Small NHWC input: batch=2, H=16, W=16, C=4
    x = jax.random.normal(key, (2, 16, 16, 4), dtype=jnp.float32)

    out = to_channels_first(x)
    out = jax.block_until_ready(out)

    # Verify against plain JAX permute (same semantics as torch permute(0,3,1,2)).
    ref = jnp.transpose(x, (0, 3, 1, 2))
    assert out.shape == (2, 4, 16, 16), out.shape
    assert out.dtype == x.dtype
    assert jnp.array_equal(out, ref)

    print("KERNEL_OK")
</pallas_src>

<mosaic_0001>
module attributes {stable_mosaic.version = 11 : i64} {
  func.func @_to_channels_first_kernel(%arg0: i32, %arg1: i32, %arg2: memref<1x128x4xf32, #tpu.memory_space<vmem>>, %arg3: memref<1x4x128xf32, #tpu.memory_space<vmem>>) attributes {dimension_semantics = [#tpu.dimension_semantics<parallel>, #tpu.dimension_semantics<parallel>], iteration_bounds = array<i64: 2, 2>, scalar_prefetch = 0 : i64, scratch_operands = 0 : i64, tpu.core_type = #tpu.core_type<tc>, window_params = [{transform_indices = @transform_0, window_bounds = array<i64: 1, 128, 4>}, {transform_indices = @transform_1, window_bounds = array<i64: 1, 4, 128>}]} {
    %c0 = arith.constant 0 : index
    %c0_0 = arith.constant 0 : index
    %c0_1 = arith.constant 0 : index
    %0 = vector.load %arg2[%c0, %c0_0, %c0_1] : memref<1x128x4xf32, #tpu.memory_space<vmem>>, vector<1x128x4xf32>
    %1 = vector.shape_cast %0 : vector<1x128x4xf32> to vector<128x4xf32>
    %2 = tpu.transpose %1, [1, 0] : vector<128x4xf32> -> vector<4x128xf32>
    %c0_2 = arith.constant 0 : index
    %c0_3 = arith.constant 0 : index
    %c0_4 = arith.constant 0 : index
    %3 = vector.load %arg3[%c0_2, %c0_3, %c0_4] : memref<1x4x128xf32, #tpu.memory_space<vmem>>, vector<1x4x128xf32>
    %4 = vector.shape_cast %3 : vector<1x4x128xf32> to vector<4x128xf32>
    %5 = vector.shape_cast %2 : vector<4x128xf32> to vector<1x4x128xf32>
    tpu.vector_store %arg3[%c0_2, %c0_3, %c0_4], %5 {strides = array<i32>} : memref<1x4x128xf32, #tpu.memory_space<vmem>>, vector<1x4x128xf32>,
    return
  }
  func.func @transform_0(%arg0: i32, %arg1: i32) -> (i32, i32, i32) {
    %c0_i32 = arith.constant 0 : i32
    %c0_i32_0 = arith.constant 0 : i32
    return %arg0, %arg1, %c0_i32 : i32, i32, i32
  }
  func.func @transform_1(%arg0: i32, %arg1: i32) -> (i32, i32, i32) {
    %c0_i32 = arith.constant 0 : i32
    %c0_i32_0 = arith.constant 0 : i32
    return %arg0, %c0_i32, %arg1 : i32, i32, i32
  }
}

</mosaic_0001>

<llo_original>
// kernel: tpu_custom_call.1
$region0: #{tpu_custom_call.1}
  #allocation0 [shape = 'u32[]', space=smem, size = 0x4, offset = 0x4, fixed_abs, tag = 'smem constant byte address 0x4 - core index']
  #allocation1 [shape = 'u32[144,128]{1,0:T(1,128)}', space=vmem, size = 0x12000, scoped, tag = 'internal scratch']
  %s0 = inlined_call_operand.vmem [shape: f32[2,256,4], index: 0, kind: input, shape index: {}]
  %s1 = inlined_call_operand.hbm [shape: f32[2,4,256], index: 1, kind: output, shape index: {}]
  %s2 = sld [smem:[#allocation0]]
  $region37: #{tpu_custom_call.1} parent=0
    _
  %s4 = ssub.s32 1, %s2
  %s5 = scalar_select 0, %s4, %s2
  $region1: #{tpu_custom_call.1} parent=0
    #allocation2 [shape = 'u8[4096]{0}', space=vmem, size = 0x1000, scoped, tag = 'output window, operand 0']
    #allocation3 [shape = 's32[2]{0}', space=sflag, size = 0x8, scoped, tag = 'scoped memory for tpu_custom_call.1']
    %6 = vsyncpa [#allocation3], 0
    %s7 = scalar_lea.sflag [#allocation3], 1
    %8 = vsyncpa %s7, 0
    loop: start=0, step=1, limit=6
    $region2: #{tpu_custom_call.1} parent=1 // loop_pre_header
      _
    $region3: #{tpu_custom_call.1} parent=1 // loop_header
      %s10 = sphi 0, %s14
      %p11 = scmp.ge.s32.totalorder %s10, 6
      %s17 = sphi 0, %s29
      %s18 = sphi 0, %s25
      %s19 = sphi 0, %s17
      %s20 = sphi 0, %s18
      %s21 = sphi 0, %s19
      %s22 = sphi 0, %s20
      %s34 = sphi 0, %s36
      %s37 = sphi 0, %s34
      %s38 = sphi 0, %s37
      %s54 = sphi 0, %s38
      %s62 = sphi 0, %s64
      %s65 = sphi 0, %s62
      %s66 = sphi 0, %s65
      %s82 = sphi 0, %s66
    $region4: #{tpu_custom_call.1} parent=1 // loop_header_branch
      %13 = sbr.rel (%p11) target = $region8
    $region5: #{tpu_custom_call.1} parent=1 // loop_body
      %s15 = ssub.s32 %s10, 1
      %s16 = ssub.s32 %s10, 2
      %s23 = sadd.s32 1, %s18
      %p24 = scmp.ge.s32.totalorder %s23, 2
      %s25 = scalar_select %p24, 0, %s23
      %s26 = sadd.s32 1, %s17
      %s27 = scalar_select %p24, %s26, %s17
      %p28 = scmp.ge.s32.totalorder %s27, 2
      %s29 = scalar_select %p28, 0, %s27
      %s30 = ssub.s32 %s17, %s29
      %s31 = ssub.s32 %s18, %s25
      %s32 = sor.u32 %s30, %s31
      %p33 = scmp.eq.s32.totalorder %s32, 0
      %s35 = sadd.s32 %s34, 1
      %s36 = scalar_select %p33, %s34, %s35
      %p39 = pneg %p33
      %p40 = scmp.eq.s32.totalorder %s10, 3
      %p41 = por %p39, %p40
      %p42 = scmp.ne.s32.totalorder %s34, %s37
      %p43 = scmp.eq.s32.totalorder %s10, 0
      %p44 = por %p42, %p43
      %p45 = scmp.ne.s32.totalorder %s34, %s37
      %p46 = scmp.eq.s32.totalorder %s15, 3
      %p47 = por %p45, %p46
      %p48 = scmp.ne.s32.totalorder %s37, %s38
      %p49 = scmp.eq.s32.totalorder %s15, 0
      %p50 = por %p48, %p49
      %p51 = scmp.ne.s32.totalorder %s37, %s38
      %p52 = scmp.eq.s32.totalorder %s16, 3
      %p53 = por %p51, %p52
      %p55 = scmp.ne.s32.totalorder %s38, %s54
      %p56 = scmp.eq.s32.totalorder %s16, 0
      %p57 = por %p55, %p56
      %s58 = ssub.s32 %s17, %s29
      %s59 = ssub.s32 %s18, %s25
      %s60 = sor.u32 %s58, %s59
      %p61 = scmp.eq.s32.totalorder %s60, 0
      %s63 = sadd.s32 %s62, 1
      %s64 = scalar_select %p61, %s62, %s63
      %p67 = pneg %p61
      %p68 = scmp.eq.s32.totalorder %s10, 3
      %p69 = por %p67, %p68
      %p70 = scmp.ne.s32.totalorder %s62, %s65
      %p71 = scmp.eq.s32.totalorder %s10, 0
      %p72 = por %p70, %p71
      %p73 = scmp.ne.s32.totalorder %s62, %s65
      %p74 = scmp.eq.s32.totalorder %s15, 3
      %p75 = por %p73, %p74
      %p76 = scmp.ne.s32.totalorder %s65, %s66
      %p77 = scmp.eq.s32.totalorder %s15, 0
      %p78 = por %p76, %p77
      %p79 = scmp.ne.s32.totalorder %s65, %s66
      %p80 = scmp.eq.s32.totalorder %s16, 3
      %p81 = por %p79, %p80
      %p83 = scmp.ne.s32.totalorder %s66, %s82
      %p84 = scmp.eq.s32.totalorder %s16, 0
      %p85 = por %p83, %p84
      %p86 = scmp.le.s32.totalorder 1, %s10
      %p87 = scmp.lt.s32.totalorder %s10, 5
      %p88 = pnand %p86, %p87
      %p89 = pneg %p88
      // Predicated region
      $region9: #{tpu_custom_call.1} parent=5 // pred_check
        _
      $region10: #{tpu_custom_call.1} parent=5 // pred_check_branch
        %91 = sbr.rel (%p88) target = $region12
      $region11: #{tpu_custom_call.1} parent=5 // pred_region
        %s92 = ssub.s32 %s10, 1
      $region12: #{tpu_custom_call.1} parent=5 // pred_fallthru
        _
      %p93 = scmp.lt.s32.totalorder %s10, 4
      // Predicated region
      $region13: #{tpu_custom_call.1} parent=5 // pred_check
        %p94 = pneg %p93
      $region14: #{tpu_custom_call.1} parent=5 // pred_check_branch
        %96 = sbr.rel (%p94) target = $region16
      $region15: #{tpu_custom_call.1} parent=5 // pred_region
        // Predicated region
        $region17: #{tpu_custom_call.1} parent=15 // pred_check
          %p97 = pneg %p44
        $region18: #{tpu_custom_call.1} parent=15 // pred_check_branch
          %99 = sbr.rel (%p97) target = $region20
        $region19: #{tpu_custom_call.1} parent=15 // pred_region
          %s100 = smul.u32 16, %s18
          %p101 = scmp.lt.s32.totalorder %s17, 1
          %s102 = scalar_select %p101, %s17, 1
          %p103 = scmp.lt.s32.totalorder %s100, 31
          %s104 = scalar_select %p103, %s100, 31
          %s105 = smul.addr %s102, 32
          %s106 = sadd.s32 %s104, %s105
          %s107 = smul.addr %s106, 8
          %s108 = scalar_lea.vmem %s0, %s107
          %s109 = smul.u32 16, %s18
        $region20: #{tpu_custom_call.1} parent=15 // pred_fallthru
          _
      $region16: #{tpu_custom_call.1} parent=5 // pred_fallthru
        _
      %p110 = scmp.le.s32.totalorder 1, %s10
      %p111 = scmp.lt.s32.totalorder %s10, 5
      %p112 = pnand %p110, %p111
      %p113 = pneg %p112
      // Predicated region
      $region21: #{tpu_custom_call.1} parent=5 // pred_check
        _
      $region22: #{tpu_custom_call.1} parent=5 // pred_check_branch
        %115 = sbr.rel (%p112) target = $region24
      $region23: #{tpu_custom_call.1} parent=5 // pred_region
        %s116 = ssub.s32 %s10, 1
        %s117 = smul.u32 16, %s20
        %p118 = scmp.lt.s32.totalorder %s19, 1
        %s119 = scalar_select %p118, %s19, 1
        %p120 = scmp.lt.s32.totalorder %s117, 31
        %s121 = scalar_select %p120, %s117, 31
        %s122 = smul.addr %s119, 32
        %s123 = sadd.s32 %s121, %s122
        %s124 = smul.addr %s123, 8
        %s125 = scalar_lea.vmem %s0, %s124
        %p126 = pneg %p50
        %p127 = pneg %p47
        %p128 = pneg %p78
        %p129 = pneg %p75
        %s130 = sand.u32 %s65, 1
        %s131 = scalar_lea.sflag [#allocation3], %s130
        %s132 = sand.u32 %s65, 1
        %s133 = smul.addr %s132, 4
        %s134 = scalar_lea.vmem [#allocation2], %s133
        %s135 = smul.u32 16, %s20
        %p136 = scmp.lt.s32.totalorder %s19, 1
        %s137 = scalar_select %p136, %s19, 1
        %p138 = scmp.lt.s32.totalorder %s135, 31
        %s139 = scalar_select %p138, %s135, 31
        %s140 = smul.addr %s137, 32
        %s141 = sadd.s32 %s139, %s140
        %s142 = smul.addr %s141, 8
        %s143 = scalar_lea.vmem %s0, %s142
        %s144 = smul.u32 16, %s20
        %v145 = vld [vmem:[%s143] sm:$0xff]
        %v146 = vld [vmem:[%s143 + $0x8] sm:$0xff]
        %v147 = vld [vmem:[%s143 + $0x10] sm:$0xff]
        %v148 = vld [vmem:[%s143 + $0x18] sm:$0xff]
        %v149 = vld [vmem:[%s143 + $0x20] sm:$0xff]
        %v150 = vld [vmem:[%s143 + $0x28] sm:$0xff]
        %v151 = vld [vmem:[%s143 + $0x30] sm:$0xff]
        %v152 = vld [vmem:[%s143 + $0x38] sm:$0xff]
        %v153 = vld [vmem:[%s143 + $0x40] sm:$0xff]
        %v154 = vld [vmem:[%s143 + $0x48] sm:$0xff]
        %v155 = vld [vmem:[%s143 + $0x50] sm:$0xff]
        %v156 = vld [vmem:[%s143 + $0x58] sm:$0xff]
        %v157 = vld [vmem:[%s143 + $0x60] sm:$0xff]
        %v158 = vld [vmem:[%s143 + $0x68] sm:$0xff]
        %v159 = vld [vmem:[%s143 + $0x70] sm:$0xff]
        %v160 = vld [vmem:[%s143 + $0x78] sm:$0xff]
        %161 = vxpose.xlu0.b32.start [1/16] %v145, 128
        %162 = vxpose.xlu0.b32.cont [2/16] %v146, 128
        %163 = vxpose.xlu0.b32.cont [3/16] %v147, 128
        %164 = vxpose.xlu0.b32.cont [4/16] %v148, 128
        %165 = vxpose.xlu0.b32.cont [5/16] %v149, 128
        %166 = vxpose.xlu0.b32.cont [6/16] %v150, 128
        %167 = vxpose.xlu0.b32.cont [7/16] %v151, 128
        %168 = vxpose.xlu0.b32.cont [8/16] %v152, 128
        %169 = vxpose.xlu0.b32.cont [9/16] %v153, 128
        %170 = vxpose.xlu0.b32.cont [10/16] %v154, 128
        %171 = vxpose.xlu0.b32.cont [11/16] %v155, 128
        %172 = vxpose.xlu0.b32.cont [12/16] %v156, 128
        %173 = vxpose.xlu0.b32.cont [13/16] %v157, 128
        %174 = vxpose.xlu0.b32.cont [14/16] %v158, 128
        %175 = vxpose.xlu0.b32.cont [15/16] %v159, 128
        %176 = vxpose.xlu0.b32.end [16/16] %v160, 128
        %v177 = vpop.trf.xlu0
        %v178 = vpop.trf.xlu0
        %v179 = vpop.trf.xlu0
        %v180 = vpop.trf.xlu0
        %v181 = vpop.trf.xlu0
        %v182 = vpop.trf.xlu0
        %v183 = vpop.trf.xlu0
        %v184 = vpop.trf.xlu0
        %v185 = vpop.trf.xlu0
        %v186 = vpop.trf.xlu0
        %v187 = vpop.trf.xlu0
        %v188 = vpop.trf.xlu0
        %v189 = vpop.trf.xlu0
        %v190 = vpop.trf.xlu0
        %v191 = vpop.trf.xlu0
        %v192 = vpop.trf.xlu0
        %193 = vst [vmem:[%s134] sm:$0xf] %v177
        %s194 = sand.u32 %s65, 1
        %s195 = scalar_lea.sflag [#allocation3], %s194
        %s196 = sand.u32 %s65, 1
        %s197 = smul.addr %s196, 4
        %s198 = scalar_lea.vmem [#allocation2], %s197
        // Predicated region
        $region25: #{tpu_custom_call.1} parent=23 // pred_check
          %p199 = pneg %p75
        $region26: #{tpu_custom_call.1} parent=23 // pred_check_branch
          %201 = sbr.rel (%p199) target = $region28
        $region27: #{tpu_custom_call.1} parent=23 // pred_region
          %s203 = ssub.s32 64, 64
          %204 = vsyncadd %s195, %s203
          %s205 = smul.addr %s19, 2
          %s206 = sadd.s32 %s20, %s205
          %s207 = smul.addr %s206, 64
          %s208 = scalar_lea.hbm %s1, %s207
          %s210 = sshll.u32 %s198, 4
          %s211 = int_to_ptr.vmem [resolvable:$true] %s210
          %213 = dma.vmem_to_hbm [thread:$0]  %s211, 64, %s208, %s195
        $region28: #{tpu_custom_call.1} parent=23 // pred_fallthru
          _
      $region24: #{tpu_custom_call.1} parent=5 // pred_fallthru
        _
      %p214 = scmp.le.s32.totalorder 2, %s10
      // Predicated region
      $region29: #{tpu_custom_call.1} parent=5 // pred_check
        %p215 = pneg %p214
      $region30: #{tpu_custom_call.1} parent=5 // pred_check_branch
        %217 = sbr.rel (%p215) target = $region32
      $region31: #{tpu_custom_call.1} parent=5 // pred_region
        %s218 = ssub.s32 %s10, 2
        // Predicated region
        $region33: #{tpu_custom_call.1} parent=31 // pred_check
          %p219 = pneg %p81
        $region34: #{tpu_custom_call.1} parent=31 // pred_check_branch
          %221 = sbr.rel (%p219) target = $region36
        $region35: #{tpu_custom_call.1} parent=31 // pred_region
          %s222 = sand.u32 %s66, 1
          %s223 = scalar_lea.sflag [#allocation3], %s222
          %s224 = sand.u32 %s66, 1
          %s225 = smul.addr %s224, 4
          %s226 = scalar_lea.vmem [#allocation2], %s225
          %227 = dma.done %s223, 64
        $region36: #{tpu_custom_call.1} parent=31 // pred_fallthru
          _
      $region32: #{tpu_custom_call.1} parent=5 // pred_fallthru
        _
    $region6: #{tpu_custom_call.1} parent=1 // loop_footer
      %s14 = sadd.s32 1, %s10
    $region7: #{tpu_custom_call.1} parent=1 // loop_footer_branch
      %9 = sbr.rel target = $region3
    $region8: #{tpu_custom_call.1} parent=1 // loop_exit
      _
    %228 = vsyncpa [#allocation3], 1
    %s229 = scalar_lea.sflag [#allocation3], 1
    %230 = vsyncpa %s229, 1

</llo_original>
